<compile_context>
chip_gen: v7x
topology: tpu7x:2x2x1
jax: 0.10.0
libtpu: 0.0.40
codegen_flags: <defaults>
</compile_context>

<pallas_src>
import jax
import jax.numpy as jnp
from jax import lax
from jax.experimental import pallas as pl
from jax.experimental.pallas import tpu as pltpu

_EPS = 1e-12  # torch.nn.functional.normalize default eps


def _round_up(x, m):
    return ((x + m - 1) // m) * m


def _inv_norm(x, eps=_EPS):
    # rsqrt(max(sum(x^2), eps^2)) == 1 / max(||x||_2, eps)   (EUP, not VALU)
    return lax.rsqrt(jnp.maximum(jnp.sum(x * x, axis=-1, keepdims=True), eps * eps))


def _prep_text(text_embeds, shift):
    """Batch-independent text path of the module: normalize -> +shift -> normalize.

    Shared by the kernel wrapper (computed once per forward, f32) and the
    pure-JAX reference so the numerics are identical.
    """
    text = text_embeds.astype(jnp.float32)
    text = text * _inv_norm(text)
    text = text + shift.astype(jnp.float32)          # Shifter (do_shift=True)
    return text * _inv_norm(text)


# ----------------------------------------------------------------------------
# Pallas kernel: image-encoder matmul (K-reduction) + normalize + class logits
# ----------------------------------------------------------------------------
def tts_kernel(img_ref, wimg_ref, textT_ref, scale_ref, out_ref, acc_ref):
    k = pl.program_id(1)

    @pl.when(k == 0)
    def _init():
        acc_ref[...] = jnp.zeros_like(acc_ref)

    # Synthetic image encoder: bf16 MXU matmul, f32 accumulation over F tiles.
    acc_ref[...] += jnp.dot(img_ref[...], wimg_ref[...],
                            preferred_element_type=jnp.float32)

    @pl.when(k == pl.num_programs(1) - 1)
    def _finalize():
        # L2-normalize the image features and fold in exp(logit_scale) (f32),
        # then cast to bf16 for the second MXU matmul.
        img_feat = acc_ref[...]                                   # [tm, D_pad] f32
        scale = jnp.exp(scale_ref[0])
        img_feat = (img_feat * (_inv_norm(img_feat) * scale)).astype(jnp.bfloat16)

        # logits[b, n] = img_feat[b, :] . text[:, n]  -- text already
        # normalized/shifted/normalized, pre-transposed to [D_pad, N_pad] bf16.
        logits = jnp.dot(img_feat, textT_ref[...],
                         preferred_element_type=jnp.float32)
        out_ref[...] = logits.astype(out_ref.dtype)


# ----------------------------------------------------------------------------
# One-time prep of the frozen encoder weights (cast + pad) -- hoisted out of
# the per-call path since the encoder is frozen.
# ----------------------------------------------------------------------------
def prepare_image_encoder_weights(w_img, *, tk=512):
    assert tk % 128 == 0
    F, D = w_img.shape
    tk_eff = min(tk, _round_up(F, 128))
    F_pad = _round_up(F, tk_eff)
    D_pad = _round_up(D, 128)
    w_pad = jnp.pad(w_img.astype(jnp.bfloat16),
                    ((0, F_pad - F), (0, D_pad - D)))
    return w_pad, tk_eff, D_pad


def test_time_shift_tuning_forward(image, w_img_prepped, text_embeds, shift,
                                   logit_scale, *, tm=None):
    """image: [B, C, H, W] float32 (NCHW); returns logits [B, num_classes]."""
    w_pad, tk_eff, D_pad = w_img_prepped
    F_pad = w_pad.shape[0]

    B = image.shape[0]
    F = 1
    for s in image.shape[1:]:
        F *= s
    assert F <= F_pad

    N, D = text_embeds.shape
    assert D <= D_pad
    N_pad = _round_up(N, 128)                 # lane-dense, unmasked output store

    # Adaptive batch tile: big enough to reuse W_img across many rows, small
    # enough that B_pad//tm >= 2 for large B (2-TC sharding on v7x).
    if tm is None:
        tm = max(8, min(_round_up(B, 8), 128))
    assert tm % 8 == 0
    B_pad = _round_up(B, tm)

    # ---- per-call image prep (image changes every call) ----
    img_flat = image.reshape(B, F).astype(jnp.bfloat16)
    img_flat = jnp.pad(img_flat, ((0, B_pad - B), (0, F_pad - F)))

    # ---- per-forward text prep: batch-independent, computed ONCE (not per
    # B tile / per K step inside the kernel).  Pre-transposed to [D_pad, N_pad]
    # bf16 so the in-kernel logits matmul is a plain lane-aligned contraction.
    text = _prep_text(text_embeds, shift)                 # [N, D] f32
    textT = jnp.pad(text.T.astype(jnp.bfloat16),
                    ((0, D_pad - D), (0, N_pad - N)))     # [D_pad, N_pad] bf16

    grid = (B_pad // tm, F_pad // tk_eff)

    # ---- explicit VMEM budget (v5e scoped default is 16 MiB, v7x physical 64) ----
    vmem_need = (
        2 * tm * tk_eff * 2           # image tiles (bf16, double-buffered)
        + 2 * tk_eff * D_pad * 2      # W_img tiles (bf16, double-buffered)
        + 2 * D_pad * N_pad * 2       # resident text (bf16, conservative x2)
        + 2 * tm * N_pad * 4          # output block (f32)
        + tm * D_pad * 4)             # f32 accumulator scratch
    vmem_limit = int(min(max(2 * vmem_need, 32 << 20), 96 << 20))

    out = pl.pallas_call(
        tts_kernel,
        out_shape=jax.ShapeDtypeStruct((B_pad, N_pad), jnp.float32),
        grid=grid,
        in_specs=[
            pl.BlockSpec((tm, tk_eff), lambda i, k: (i, k)),       # image tiles (bf16)
            pl.BlockSpec((tk_eff, D_pad), lambda i, k: (k, 0)),    # W_img tiles (bf16)
            pl.BlockSpec((D_pad, N_pad), lambda i, k: (0, 0)),     # text^T, resident (bf16)
            pl.BlockSpec(memory_space=pltpu.MemorySpace.SMEM),     # logit_scale [1]
        ],
        out_specs=pl.BlockSpec((tm, N_pad), lambda i, k: (i, 0)),
        scratch_shapes=[pltpu.VMEM((tm, D_pad), jnp.float32)],     # f32 accumulator
        compiler_params=pltpu.CompilerParams(
            dimension_semantics=("parallel", "arbitrary"),
            vmem_limit_bytes=vmem_limit),
    )(img_flat, w_pad, textT, logit_scale)

    return out[:B, :N]


# ----------------------------------------------------------------------------
# Pure-JAX reference (mirrors the kernel's mixed-precision policy: bf16 MXU
# operands, f32 accumulation -- the real module runs the CLIP encoder in half
# precision anyway).  Implements the torch forward's 2-D-logits branch.
# ----------------------------------------------------------------------------
def reference_forward(image, w_img, text_embeds, shift, logit_scale):
    B = image.shape[0]
    img = image.reshape(B, -1).astype(jnp.bfloat16)
    img_feat = jnp.dot(img, w_img.astype(jnp.bfloat16),
                       preferred_element_type=jnp.float32)
    scale = jnp.exp(logit_scale[0])
    img_feat = (img_feat * (_inv_norm(img_feat) * scale)).astype(jnp.bfloat16)
    text = _prep_text(text_embeds, shift).astype(jnp.bfloat16)       # [N, D]
    logits = jnp.dot(text, img_feat.T,
                     preferred_element_type=jnp.float32)             # [N, B]
    return logits.T                                                  # logits.T branch


if __name__ == "__main__":
    # Small, deterministic shapes consistent with the module's forward.
    B, C, H, W = 2, 3, 16, 16          # image, NCHW
    D = 32                             # embed_dim
    N = 8                              # num_classes

    key = jax.random.PRNGKey(0)
    k_img, k_wimg, k_text, k_shift = jax.random.split(key, 4)

    image = jax.random.normal(k_img, (B, C, H, W), dtype=jnp.float32)
    # Frozen synthetic image-encoder projection (stands in for the CLIP ViT).
    w_img = jax.random.normal(k_wimg, (C * H * W, D), dtype=jnp.float32) * 0.02
    # text_embeds would be loaded class prompt embeddings; synthesize them.
    text_embeds = jax.random.normal(k_text, (N, D), dtype=jnp.float32)
    # Shifter: learnable global shift vector (per_label=False, do_shift=True).
    shift = jax.random.normal(k_shift, (1, D), dtype=jnp.float32) * 0.01
    # CLIP logit_scale parameter (log space); forward applies .exp().
    logit_scale = jnp.array([jnp.log(1.0 / 0.07)], dtype=jnp.float32)

    # One-time prep of the frozen weights (hoisted out of the per-call path).
    w_img_prepped = prepare_image_encoder_weights(w_img, tk=512)

    logits = test_time_shift_tuning_forward(image, w_img_prepped, text_embeds,
                                            shift, logit_scale)
    logits = jax.block_until_ready(logits)

    ref = reference_forward(image, w_img, text_embeds, shift, logit_scale)
    assert logits.shape == (B, N), logits.shape
    # Mixed-precision (bf16 operand) tolerance.
    assert jnp.allclose(logits, ref, atol=1e-2, rtol=1e-2), (logits, ref)

    print("KERNEL_OK")
</pallas_src>

<mosaic_0001>
module attributes {stable_mosaic.version = 11 : i64} {
  func.func @tts_kernel(%arg0: i32, %arg1: i32, %arg2: memref<8x512xbf16, #tpu.memory_space<vmem>>, %arg3: memref<512x128xbf16, #tpu.memory_space<vmem>>, %arg4: memref<128x128xbf16, #tpu.memory_space<vmem>>, %arg5: memref<1xf32, #tpu.memory_space<smem>>, %arg6: memref<8x128xf32, #tpu.memory_space<vmem>>, %arg7: memref<8x128xf32, #tpu.memory_space<vmem>>) attributes {dimension_semantics = [#tpu.dimension_semantics<parallel>, #tpu.dimension_semantics<arbitrary>], iteration_bounds = array<i64: 1, 2>, scalar_prefetch = 0 : i64, scratch_operands = 1 : i64, tpu.core_type = #tpu.core_type<tc>, window_params = [{transform_indices = @transform_0, window_bounds = array<i64: 8, 512>}, {transform_indices = @transform_1, window_bounds = array<i64: 512, 128>}, {pipeline_mode = #tpu.pipeline_mode<synchronous>, transform_indices = @transform_2, window_bounds = array<i64: 128, 128>}, {transform_indices = @transform_3, window_bounds = array<i64: 1>}, {transform_indices = @transform_4, window_bounds = array<i64: 8, 128>}]} {
    %c0_i32 = arith.constant 0 : i32
    %0 = arith.cmpi eq, %arg1, %c0_i32 : i32
    %1 = arith.extui %0 : i1 to i32
    %c0_i32_0 = arith.constant 0 : i32
    %2 = arith.cmpi ne, %1, %c0_i32_0 : i32
    scf.if %2 {
      %cst_9 = arith.constant 0.000000e+00 : f32
      %12 = vector.broadcast %cst_9 : f32 to vector<8x128xf32>
      %c0_10 = arith.constant 0 : index
      %c0_11 = arith.constant 0 : index
      %13 = vector.load %arg7[%c0_10, %c0_11] : memref<8x128xf32, #tpu.memory_space<vmem>>, vector<8x128xf32>
      tpu.vector_store %arg7[%c0_10, %c0_11], %12 {strides = array<i32>} : memref<8x128xf32, #tpu.memory_space<vmem>>, vector<8x128xf32>,
    } else {
    }
    %c0 = arith.constant 0 : index
    %c0_1 = arith.constant 0 : index
    %3 = vector.load %arg7[%c0, %c0_1] : memref<8x128xf32, #tpu.memory_space<vmem>>, vector<8x128xf32>
    %c0_2 = arith.constant 0 : index
    %c0_3 = arith.constant 0 : index
    %4 = vector.load %arg2[%c0_2, %c0_3] : memref<8x512xbf16, #tpu.memory_space<vmem>>, vector<8x512xbf16>
    %c0_4 = arith.constant 0 : index
    %c0_5 = arith.constant 0 : index
    %5 = vector.load %arg3[%c0_4, %c0_5] : memref<512x128xbf16, #tpu.memory_space<vmem>>, vector<512x128xbf16>
    %cst = arith.constant dense<0.000000e+00> : vector<8x128xf32>
    %6 = tpu.matmul %4, %5, %cst {dimension_numbers = #tpu.dot_dimension_numbers<[1], [0], [0], [1], [0, 0, 1, 1], [], []>} : vector<8x512xbf16>, vector<512x128xbf16>, vector<8x128xf32> -> vector<8x128xf32>
    %7 = arith.addf %3, %6 : vector<8x128xf32>
    %c0_6 = arith.constant 0 : index
    %c0_7 = arith.constant 0 : index
    %8 = vector.load %arg7[%c0_6, %c0_7] : memref<8x128xf32, #tpu.memory_space<vmem>>, vector<8x128xf32>
    tpu.vector_store %arg7[%c0_6, %c0_7], %7 {strides = array<i32>} : memref<8x128xf32, #tpu.memory_space<vmem>>, vector<8x128xf32>,
    %c1_i32 = arith.constant 1 : i32
    %9 = arith.cmpi eq, %arg1, %c1_i32 : i32
    %10 = arith.extui %9 : i1 to i32
    %c0_i32_8 = arith.constant 0 : i32
    %11 = arith.cmpi ne, %10, %c0_i32_8 : i32
    scf.if %11 {
      %c0_9 = arith.constant 0 : index
      %c0_10 = arith.constant 0 : index
      %12 = vector.load %arg7[%c0_9, %c0_10] : memref<8x128xf32, #tpu.memory_space<vmem>>, vector<8x128xf32>
      %c0_11 = arith.constant 0 : index
      %13 = memref.load %arg5[%c0_11] : memref<1xf32, #tpu.memory_space<smem>>
      %14 = math.exp %13 : f32
      %15 = arith.mulf %12, %12 : vector<8x128xf32>
      %cst_12 = arith.constant dense<0.000000e+00> : vector<8xf32>
      %16 = vector.multi_reduction <add>, %15, %cst_12 [1] : vector<8x128xf32> to vector<8xf32>
      %17 = vector.shape_cast %16 : vector<8xf32> to vector<8x1xf32>
      %cst_13 = arith.constant 1.000000e-24 : f32
      %18 = vector.broadcast %cst_13 : f32 to vector<8x1xf32>
      %19 = arith.maximumf %17, %18 : vector<8x1xf32>
      %20 = math.rsqrt %19 : vector<8x1xf32>
      %21 = vector.broadcast %14 : f32 to vector<8x1xf32>
      %22 = arith.mulf %20, %21 : vector<8x1xf32>
      %23 = vector.broadcast %22 : vector<8x1xf32> to vector<8x128xf32>
      %24 = arith.mulf %12, %23 : vector<8x128xf32>
      %25 = arith.truncf %24 : vector<8x128xf32> to vector<8x128xbf16>
      %c0_14 = arith.constant 0 : index
      %c0_15 = arith.constant 0 : index
      %26 = vector.load %arg4[%c0_14, %c0_15] : memref<128x128xbf16, #tpu.memory_space<vmem>>, vector<128x128xbf16>
      %cst_16 = arith.constant dense<0.000000e+00> : vector<8x128xf32>
      %27 = tpu.matmul %25, %26, %cst_16 {dimension_numbers = #tpu.dot_dimension_numbers<[1], [0], [0], [1], [0, 0, 1, 1], [], []>} : vector<8x128xbf16>, vector<128x128xbf16>, vector<8x128xf32> -> vector<8x128xf32>
      %c0_17 = arith.constant 0 : index
      %c0_18 = arith.constant 0 : index
      %28 = vector.load %arg6[%c0_17, %c0_18] : memref<8x128xf32, #tpu.memory_space<vmem>>, vector<8x128xf32>
      tpu.vector_store %arg6[%c0_17, %c0_18], %27 {strides = array<i32>} : memref<8x128xf32, #tpu.memory_space<vmem>>, vector<8x128xf32>,
    } else {
    }
    return
  }
  func.func @transform_0(%arg0: i32, %arg1: i32) -> (i32, i32) {
    %c0_i32 = arith.constant 0 : i32
    return %arg0, %arg1 : i32, i32
  }
  func.func @transform_1(%arg0: i32, %arg1: i32) -> (i32, i32) {
    %c0_i32 = arith.constant 0 : i32
    %c0_i32_0 = arith.constant 0 : i32
    return %arg1, %c0_i32 : i32, i32
  }
  func.func @transform_2(%arg0: i32, %arg1: i32) -> (i32, i32) {
    %c0_i32 = arith.constant 0 : i32
    %c0_i32_0 = arith.constant 0 : i32
    %c0_i32_1 = arith.constant 0 : i32
    return %c0_i32, %c0_i32_0 : i32, i32
  }
  func.func @transform_3(%arg0: i32, %arg1: i32) -> i32 {
    %c0_i32 = arith.constant 0 : i32
    %c0_i32_0 = arith.constant 0 : i32
    return %c0_i32 : i32
  }
  func.func @transform_4(%arg0: i32, %arg1: i32) -> (i32, i32) {
    %c0_i32 = arith.constant 0 : i32
    %c0_i32_0 = arith.constant 0 : i32
    return %arg0, %c0_i32 : i32, i32
  }
}

</mosaic_0001>

<llo_original>
// kernel: tpu_custom_call.1
$region0: #{tpu_custom_call.1}
  #allocation0 [shape = 'u32[]', space=smem, size = 0x4, offset = 0x4, fixed_abs, tag = 'smem constant byte address 0x4 - core index']
  #allocation1 [shape = 'u32[144,128]{1,0:T(1,128)}', space=vmem, size = 0x12000, scoped, tag = 'internal scratch']
  #allocation2 [shape = 'f32[8,128]{1,0:T(8,128)}', space=vmem, size = 0x1000, scoped, tag = 'scratch operand']
  #allocation3 [shape = 'f32[1]{0:T(128)S(6)}', space=smem, size = 0x200, scoped, tag = 'scoped memory for tpu_custom_call.1']
  %s0 = inlined_call_operand.hbm [shape: bf16[8,1024], index: 0, kind: input, shape index: {}]
  %s1 = inlined_call_operand.hbm [shape: bf16[1024,128], index: 1, kind: input, shape index: {}]
  %s2 = inlined_call_operand.hbm [shape: bf16[128,128], index: 2, kind: input, shape index: {}]
  %s3 = inlined_call_operand.<no memory space> [shape: f32[1], index: 3, kind: input, shape index: {}]
  %s4 = inlined_call_operand.hbm [shape: f32[8,128], index: 4, kind: output, shape index: {}]
  %s5 = sld [smem:[#allocation0]]
  $region69: #{tpu_custom_call.1} parent=0
    _
  %s7 = ssub.s32 1, %s5
  %s8 = scalar_select 0, %s7, %s5
  %9 = sst [smem:[#allocation3]] %s3
  $region1: #{tpu_custom_call.1} parent=0
    #allocation4 [shape = 'u8[16384]{0}', space=vmem, size = 0x4000, scoped, tag = 'input window, operand 0']
    #allocation5 [shape = 's32[2]{0}', space=sflag, size = 0x8, scoped, tag = 'scoped memory for tpu_custom_call.1']
    #allocation6 [shape = 's32[2]{0}', space=sflag, size = 0x8, scoped, tag = 'scoped memory for tpu_custom_call.1']
    #allocation7 [shape = 'u8[262144]{0}', space=vmem, size = 0x40000, scoped, tag = 'input window, operand 1']
    #allocation8 [shape = 's32[2]{0}', space=sflag, size = 0x8, scoped, tag = 'scoped memory for tpu_custom_call.1']
    #allocation9 [shape = 'u8[32768]{0}', space=vmem, size = 0x8000, scoped, tag = 'input window, operand 2, single buffered']
    #allocation10 [shape = 'u8[4096]{0}', space=vmem, size = 0x1000, scoped, tag = 'output window, operand 0, single buffered']
    %10 = vsyncpa [#allocation5], 0
    %s11 = scalar_lea.sflag [#allocation5], 1
    %12 = vsyncpa %s11, 0
    %13 = vsyncpa [#allocation8], 0
    %s14 = scalar_lea.sflag [#allocation8], 1
    %15 = vsyncpa %s14, 0
    %16 = vsyncpa [#allocation6], 0
    loop: start=0, step=1, limit=4
    $region2: #{tpu_custom_call.1} parent=1 // loop_pre_header
      _
    $region3: #{tpu_custom_call.1} parent=1 // loop_header
      %s18 = sphi 0, %s22
      %p19 = scmp.ge.s32.totalorder %s18, 4
      %s25 = sphi 0, %s37
      %s26 = sphi 0, %s33
      %s27 = sphi 0, %s25
      %s28 = sphi 0, %s26
      %s29 = sphi 0, %s27
      %s30 = sphi 0, %s28
      %s42 = sphi 0, %s44
      %s45 = sphi 0, %s42
      %s46 = sphi 0, %s45
      %s62 = sphi 0, %s46
      %s68 = sphi 0, %s70
      %s71 = sphi 0, %s68
      %s72 = sphi 0, %s71
      %s88 = sphi 0, %s72
      %s92 = sphi 0, %s92
      %s94 = sphi 0, %s92
      %s95 = sphi 0, %s94
      %s109 = sphi 0, %s95
      %s113 = sphi 0, %s113
      %s115 = sphi 0, %s113
      %s116 = sphi 0, %s115
      %s130 = sphi 0, %s116
      %s136 = sphi 0, %s138
      %s139 = sphi 0, %s136
      %s140 = sphi 0, %s139
      %s156 = sphi 0, %s140
    $region4: #{tpu_custom_call.1} parent=1 // loop_header_branch
      %21 = sbr.rel (%p19) target = $region8
    $region5: #{tpu_custom_call.1} parent=1 // loop_body
      %s23 = ssub.s32 %s18, 1
      %s24 = ssub.s32 %s18, 2
      %s31 = sadd.s32 1, %s26
      %p32 = scmp.ge.s32.totalorder %s31, 2
      %s33 = scalar_select %p32, 0, %s31
      %s34 = sadd.s32 1, %s25
      %s35 = scalar_select %p32, %s34, %s25
      %p36 = scmp.ge.s32.totalorder %s35, 1
      %s37 = scalar_select %p36, 0, %s35
      %s38 = ssub.s32 %s25, %s37
      %s39 = ssub.s32 %s26, %s33
      %s40 = sor.u32 %s38, %s39
      %p41 = scmp.eq.s32.totalorder %s40, 0
      %s43 = sadd.s32 %s42, 1
      %s44 = scalar_select %p41, %s42, %s43
      %p47 = pneg %p41
      %p48 = scmp.eq.s32.totalorder %s18, 1
      %p49 = por %p47, %p48
      %p50 = scmp.ne.s32.totalorder %s42, %s45
      %p51 = scmp.eq.s32.totalorder %s18, 0
      %p52 = por %p50, %p51
      %p53 = scmp.ne.s32.totalorder %s42, %s45
      %p54 = scmp.eq.s32.totalorder %s23, 1
      %p55 = por %p53, %p54
      %p56 = scmp.ne.s32.totalorder %s45, %s46
      %p57 = scmp.eq.s32.totalorder %s23, 0
      %p58 = por %p56, %p57
      %p59 = scmp.ne.s32.totalorder %s45, %s46
      %p60 = scmp.eq.s32.totalorder %s24, 1
      %p61 = por %p59, %p60
      %p63 = scmp.ne.s32.totalorder %s46, %s62
      %p64 = scmp.eq.s32.totalorder %s24, 0
      %p65 = por %p63, %p64
      %s66 = ssub.s32 %s26, %s33
      %p67 = scmp.eq.s32.totalorder %s66, 0
      %s69 = sadd.s32 %s68, 1
      %s70 = scalar_select %p67, %s68, %s69
      %p73 = pneg %p67
      %p74 = scmp.eq.s32.totalorder %s18, 1
      %p75 = por %p73, %p74
      %p76 = scmp.ne.s32.totalorder %s68, %s71
      %p77 = scmp.eq.s32.totalorder %s18, 0
      %p78 = por %p76, %p77
      %p79 = scmp.ne.s32.totalorder %s68, %s71
      %p80 = scmp.eq.s32.totalorder %s23, 1
      %p81 = por %p79, %p80
      %p82 = scmp.ne.s32.totalorder %s71, %s72
      %p83 = scmp.eq.s32.totalorder %s23, 0
      %p84 = por %p82, %p83
      %p85 = scmp.ne.s32.totalorder %s71, %s72
      %p86 = scmp.eq.s32.totalorder %s24, 1
      %p87 = por %p85, %p86
      %p89 = scmp.ne.s32.totalorder %s72, %s88
      %p90 = scmp.eq.s32.totalorder %s24, 0
      %p91 = por %p89, %p90
      %s93 = sadd.s32 %s92, 1
      %p96 = scmp.eq.s32.totalorder %s18, 1
      %p97 = scmp.ne.s32.totalorder %s92, %s94
      %p98 = scmp.eq.s32.totalorder %s18, 0
      %p99 = por %p97, %p98
      %p100 = scmp.ne.s32.totalorder %s92, %s94
      %p101 = scmp.eq.s32.totalorder %s23, 1
      %p102 = por %p100, %p101
      %p103 = scmp.ne.s32.totalorder %s94, %s95
      %p104 = scmp.eq.s32.totalorder %s23, 0
      %p105 = por %p103, %p104
      %p106 = scmp.ne.s32.totalorder %s94, %s95
      %p107 = scmp.eq.s32.totalorder %s24, 1
      %p108 = por %p106, %p107
      %p110 = scmp.ne.s32.totalorder %s95, %s109
      %p111 = scmp.eq.s32.totalorder %s24, 0
      %p112 = por %p110, %p111
      %s114 = sadd.s32 %s113, 1
      %p117 = scmp.eq.s32.totalorder %s18, 1
      %p118 = scmp.ne.s32.totalorder %s113, %s115
      %p119 = scmp.eq.s32.totalorder %s18, 0
      %p120 = por %p118, %p119
      %p121 = scmp.ne.s32.totalorder %s113, %s115
      %p122 = scmp.eq.s32.totalorder %s23, 1
      %p123 = por %p121, %p122
      %p124 = scmp.ne.s32.totalorder %s115, %s116
      %p125 = scmp.eq.s32.totalorder %s23, 0
      %p126 = por %p124, %p125
      %p127 = scmp.ne.s32.totalorder %s115, %s116
      %p128 = scmp.eq.s32.totalorder %s24, 1
      %p129 = por %p127, %p128
      %p131 = scmp.ne.s32.totalorder %s116, %s130
      %p132 = scmp.eq.s32.totalorder %s24, 0
      %p133 = por %p131, %p132
      %s134 = ssub.s32 %s25, %s37
      %p135 = scmp.eq.s32.totalorder %s134, 0
      %s137 = sadd.s32 %s136, 1
      %s138 = scalar_select %p135, %s136, %s137
      %p141 = pneg %p135
      %p142 = scmp.eq.s32.totalorder %s18, 1
      %p143 = por %p141, %p142
      %p144 = scmp.ne.s32.totalorder %s136, %s139
      %p145 = scmp.eq.s32.totalorder %s18, 0
      %p146 = por %p144, %p145
      %p147 = scmp.ne.s32.totalorder %s136, %s139
      %p148 = scmp.eq.s32.totalorder %s23, 1
      %p149 = por %p147, %p148
      %p150 = scmp.ne.s32.totalorder %s139, %s140
      %p151 = scmp.eq.s32.totalorder %s23, 0
      %p152 = por %p150, %p151
      %p153 = scmp.ne.s32.totalorder %s139, %s140
      %p154 = scmp.eq.s32.totalorder %s24, 1
      %p155 = por %p153, %p154
      %p157 = scmp.ne.s32.totalorder %s140, %s156
      %p158 = scmp.eq.s32.totalorder %s24, 0
      %p159 = por %p157, %p158
      %p160 = scmp.le.s32.totalorder 1, %s18
      %p161 = scmp.lt.s32.totalorder %s18, 3
      %p162 = pnand %p160, %p161
      %p163 = pneg %p162
      // Predicated region
      $region9: #{tpu_custom_call.1} parent=5 // pred_check
        _
      $region10: #{tpu_custom_call.1} parent=5 // pred_check_branch
        %165 = sbr.rel (%p162) target = $region12
      $region11: #{tpu_custom_call.1} parent=5 // pred_region
        %s166 = ssub.s32 %s18, 1
        // Predicated region
        $region13: #{tpu_custom_call.1} parent=11 // pred_check
          %p167 = pneg %p105
        $region14: #{tpu_custom_call.1} parent=11 // pred_check_branch
          %169 = sbr.rel (%p167) target = $region16
        $region15: #{tpu_custom_call.1} parent=11 // pred_region
          %s171 = ssub.s32 1024, 1024
          %172 = vsyncadd [#allocation8], %s171
          %s173 = sshll.u32 [#allocation9], 4
          %s174 = int_to_ptr.vmem [resolvable:$true] %s173
          %179 = dma.hbm_to_vmem [thread:$0]  %s2, 1024, %s174, [#allocation8], 64, 64, 4
        $region16: #{tpu_custom_call.1} parent=11 // pred_fallthru
          _
        // Predicated region
        $region17: #{tpu_custom_call.1} parent=11 // pred_check
          %p180 = pneg %p126
        $region18: #{tpu_custom_call.1} parent=11 // pred_check_branch
          %182 = sbr.rel (%p180) target = $region20
        $region19: #{tpu_custom_call.1} parent=11 // pred_region
          _
        $region20: #{tpu_custom_call.1} parent=11 // pred_fallthru
          _
      $region12: #{tpu_custom_call.1} parent=5 // pred_fallthru
        _
      %p183 = scmp.lt.s32.totalorder %s18, 2
      // Predicated region
      $region21: #{tpu_custom_call.1} parent=5 // pred_check
        %p184 = pneg %p183
      $region22: #{tpu_custom_call.1} parent=5 // pred_check_branch
        %186 = sbr.rel (%p184) target = $region24
      $region23: #{tpu_custom_call.1} parent=5 // pred_region
        // Predicated region
        $region25: #{tpu_custom_call.1} parent=23 // pred_check
          %p187 = pneg %p52
        $region26: #{tpu_custom_call.1} parent=23 // pred_check_branch
          %189 = sbr.rel (%p187) target = $region28
        $region27: #{tpu_custom_call.1} parent=23 // pred_region
          %s190 = sand.u32 %s42, 1
          %s191 = scalar_lea.sflag [#allocation5], %s190
          %s192 = sand.u32 %s42, 1
          %s193 = smul.addr %s192, 16
          %s194 = scalar_lea.vmem [#allocation4], %s193
          %s195 = smul.u32 4, %s26
          %s197 = ssub.s32 256, 256
          %198 = vsyncadd %s191, %s197
          %s199 = smul.addr %s25, 8
          %s200 = sadd.s32 %s195, %s199
          %s201 = smul.addr %s200, 64
          %s202 = scalar_lea.hbm %s0, %s201
          %s204 = sshll.u32 %s194, 4
          %s205 = int_to_ptr.vmem [resolvable:$true] %s204
          %207 = dma.hbm_to_vmem [thread:$0]  %s202, 256, %s205, %s191
        $region28: #{tpu_custom_call.1} parent=23 // pred_fallthru
          _
        // Predicated region
        $region29: #{tpu_custom_call.1} parent=23 // pred_check
          %p208 = pneg %p78
        $region30: #{tpu_custom_call.1} parent=23 // pred_check_branch
          %210 = sbr.rel (%p208) target = $region32
        $region31: #{tpu_custom_call.1} parent=23 // pred_region
          %s211 = sand.u32 %s18, 1
          %s212 = scalar_lea.sflag [#allocation8], %s211
          %s213 = sand.u32 %s68, 1
          %s214 = smul.addr %s213, 256
          %s215 = scalar_lea.vmem [#allocation7], %s214
          %s216 = smul.u32 64, %s26
          %s218 = ssub.s32 4096, 4096
          %219 = vsyncadd %s212, %s218
          %s220 = smul.addr %s216, 64
          %s221 = scalar_lea.hbm %s1, %s220
          %s222 = sshll.u32 %s215, 4
          %s223 = int_to_ptr.vmem [resolvable:$true] %s222
          %228 = dma.hbm_to_vmem [thread:$0]  %s221, 4096, %s223, %s212, 64, 64, 4
        $region32: #{tpu_custom_call.1} parent=23 // pred_fallthru
          _
      $region24: #{tpu_custom_call.1} parent=5 // pred_fallthru
        _
      %p229 = scmp.le.s32.totalorder 1, %s18
      %p230 = scmp.lt.s32.totalorder %s18, 3
      %p231 = pnand %p229, %p230
      %p232 = pneg %p231
      // Predicated region
      $region33: #{tpu_custom_call.1} parent=5 // pred_check
        _
      $region34: #{tpu_custom_call.1} parent=5 // pred_check_branch
        %234 = sbr.rel (%p231) target = $region36
      $region35: #{tpu_custom_call.1} parent=5 // pred_region
        %s235 = ssub.s32 %s18, 1
        %s236 = sand.u32 %s45, 1
        %s237 = scalar_lea.sflag [#allocation5], %s236
        %s238 = sand.u32 %s45, 1
        %s239 = smul.addr %s238, 16
        %s240 = scalar_lea.vmem [#allocation4], %s239
        // Predicated region
        $region37: #{tpu_custom_call.1} parent=35 // pred_check
          %p241 = pneg %p58
        $region38: #{tpu_custom_call.1} parent=35 // pred_check_branch
          %243 = sbr.rel (%p241) target = $region40
        $region39: #{tpu_custom_call.1} parent=35 // pred_region
          %244 = dma.done %s237, 256
        $region40: #{tpu_custom_call.1} parent=35 // pred_fallthru
          _
        %s245 = sand.u32 %s23, 1
        %s246 = scalar_lea.sflag [#allocation8], %s245
        %s247 = sand.u32 %s71, 1
        %s248 = smul.addr %s247, 256
        %s249 = scalar_lea.vmem [#allocation7], %s248
        // Predicated region
        $region41: #{tpu_custom_call.1} parent=35 // pred_check
          %p250 = pneg %p84
        $region42: #{tpu_custom_call.1} parent=35 // pred_check_branch
          %252 = sbr.rel (%p250) target = $region44
        $region43: #{tpu_custom_call.1} parent=35 // pred_region
          %253 = dma.done %s246, 4096
        $region44: #{tpu_custom_call.1} parent=35 // pred_fallthru
          _
        // Predicated region
        $region45: #{tpu_custom_call.1} parent=35 // pred_check
          %p254 = pneg %p105
        $region46: #{tpu_custom_call.1} parent=35 // pred_check_branch
          %256 = sbr.rel (%p254) target = $region48
        $region47: #{tpu_custom_call.1} parent=35 // pred_region
          %257 = dma.done [#allocation8], 1024
        $region48: #{tpu_custom_call.1} parent=35 // pred_fallthru
          _
        %s258 = sand.u32 %s45, 1
        %s259 = scalar_lea.sflag [#allocation5], %s258
        %s260 = sand.u32 %s45, 1
        %s261 = smul.addr %s260, 16
        %s262 = scalar_lea.vmem [#allocation4], %s261
        %p263 = pneg %p58
        %p264 = pneg %p55
        %s265 = sand.u32 %s23, 1
        %s266 = scalar_lea.sflag [#allocation8], %s265
        %s267 = sand.u32 %s71, 1
        %s268 = smul.addr %s267, 256
        %s269 = scalar_lea.vmem [#allocation7], %s268
        %p270 = pneg %p84
        %p271 = pneg %p81
        %p272 = pneg %p105
        %p273 = pneg %p102
        %p274 = pneg %p126
        %p275 = pneg %p123
        %p276 = pneg %p152
        %p277 = pneg %p149
        %s278 = smul.u32 4, %s28
        %s279 = smul.u32 64, %s28
        %p281 = scmp.eq.s32.totalorder %s28, 0
        // Predicated region
        $region49: #{tpu_custom_call.1} parent=35 // pred_check
          %p282 = pneg %p281
        $region50: #{tpu_custom_call.1} parent=35 // pred_check_branch
          %284 = sbr.rel (%p282) target = $region52
        $region51: #{tpu_custom_call.1} parent=35 // pred_region
          %285 = vst [vmem:[#allocation2] sm:$0xff] 0.0
        $region52: #{tpu_custom_call.1} parent=35 // pred_fallthru
          _
        %v286 = vld [vmem:[#allocation2] sm:$0xff]
        %v287 = vld [vmem:[%s240] sm:$0xff]
        %v288 = vld [vmem:[%s240 + $0x8] sm:$0xff]
        %v289 = vld [vmem:[%s249] sm:$0xf]
        %v290 = vld [vmem:[%s249 + $0x4] sm:$0xf]
        %v291 = vld [vmem:[%s249 + $0x8] sm:$0xf]
        %v292 = vld [vmem:[%s249 + $0xc] sm:$0xf]
        %v293 = vld [vmem:[%s249 + $0x10] sm:$0xf]
        %v294 = vld [vmem:[%s249 + $0x14] sm:$0xf]
        %v295 = vld [vmem:[%s249 + $0x18] sm:$0xf]
        %v296 = vld [vmem:[%s249 + $0x1c] sm:$0xf]
        %v297 = vld [vmem:[%s249 + $0x20] sm:$0xf]
        %v298 = vld [vmem:[%s249 + $0x24] sm:$0xf]
        %v299 = vld [vmem:[%s249 + $0x28] sm:$0xf]
        %v300 = vld [vmem:[%s249 + $0x2c] sm:$0xf]
        %v301 = vld [vmem:[%s249 + $0x30] sm:$0xf]
        %v302 = vld [vmem:[%s249 + $0x34] sm:$0xf]
        %v303 = vld [vmem:[%s249 + $0x38] sm:$0xf]
        %v304 = vld [vmem:[%s249 + $0x3c] sm:$0xf]
        %v305 = vld [vmem:[%s249 + $0x40] sm:$0xf]
        %v306 = vld [vmem:[%s249 + $0x44] sm:$0xf]
        %v307 = vld [vmem:[%s249 + $0x48] sm:$0xf]
        %v308 = vld [vmem:[%s249 + $0x4c] sm:$0xf]
        %v309 = vld [vmem:[%s249 + $0x50] sm:$0xf]
        %v310 = vld [vmem:[%s249 + $0x54] sm:$0xf]
        %v311 = vld [vmem:[%s249 + $0x58] sm:$0xf]
        %v312 = vld [vmem:[%s249 + $0x5c] sm:$0xf]
        %v313 = vld [vmem:[%s249 + $0x60] sm:$0xf]
        %v314 = vld [vmem:[%s249 + $0x64] sm:$0xf]
        %v315 = vld [vmem:[%s249 + $0x68] sm:$0xf]
        %v316 = vld [vmem:[%s249 + $0x6c] sm:$0xf]
        %v317 = vld [vmem:[%s249 + $0x70] sm:$0xf]
        %v318 = vld [vmem:[%s249 + $0x74] sm:$0xf]
        %v319 = vld [vmem:[%s249 + $0x78] sm:$0xf]
        %v320 = vld [vmem:[%s249 + $0x7c] sm:$0xf]
        %v321 = vld [vmem:[%s249 + $0x80] sm:$0xf]
        %v322 = vld [vmem:[%s249 + $0x84] sm:$0xf]
        %v323 = vld [vmem:[%s249 + $0x88] sm:$0xf]
        %v324 = vld [vmem:[%s249 + $0x8c] sm:$0xf]
        %v325 = vld [vmem:[%s249 + $0x90] sm:$0xf]
        %v326 = vld [vmem:[%s249 + $0x94] sm:$0xf]
        %v327 = vld [vmem:[%s249 + $0x98] sm:$0xf]
        %v328 = vld [vmem:[%s249 + $0x9c] sm:$0xf]
        %v329 = vld [vmem:[%s249 + $0xa0] sm:$0xf]
        %v330 = vld [vmem:[%s249 + $0xa4] sm:$0xf]
        %v331 = vld [vmem:[%s249 + $0xa8] sm:$0xf]
        %v332 = vld [vmem:[%s249 + $0xac] sm:$0xf]
        %v333 = vld [vmem:[%s249 + $0xb0] sm:$0xf]
        %v334 = vld [vmem:[%s249 + $0xb4] sm:$0xf]
        %v335 = vld [vmem:[%s249 + $0xb8] sm:$0xf]
        %v336 = vld [vmem:[%s249 + $0xbc] sm:$0xf]
        %v337 = vld [vmem:[%s249 + $0xc0] sm:$0xf]
        %v338 = vld [vmem:[%s249 + $0xc4] sm:$0xf]
        %v339 = vld [vmem:[%s249 + $0xc8] sm:$0xf]
        %v340 = vld [vmem:[%s249 + $0xcc] sm:$0xf]
        %v341 = vld [vmem:[%s249 + $0xd0] sm:$0xf]
        %v342 = vld [vmem:[%s249 + $0xd4] sm:$0xf]
        %v343 = vld [vmem:[%s249 + $0xd8] sm:$0xf]
        %v344 = vld [vmem:[%s249 + $0xdc] sm:$0xf]
        %v345 = vld [vmem:[%s249 + $0xe0] sm:$0xf]
        %v346 = vld [vmem:[%s249 + $0xe4] sm:$0xf]
        %v347 = vld [vmem:[%s249 + $0xe8] sm:$0xf]
        %v348 = vld [vmem:[%s249 + $0xec] sm:$0xf]
        %v349 = vld [vmem:[%s249 + $0xf0] sm:$0xf]
        %v350 = vld [vmem:[%s249 + $0xf4] sm:$0xf]
        %v351 = vld [vmem:[%s249 + $0xf8] sm:$0xf]
        %v352 = vld [vmem:[%s249 + $0xfc] sm:$0xf]
        %v355 = vunpack.c.l.b16 %v287
        %v356 = vunpack.c.h.b16 %v287
        %v357 = vunpack.c.l.b16 %v288
        %v358 = vunpack.c.h.b16 %v288
        %v359 = vpack.c.b16 %v355, %v355
        %v360 = vpack.c.b16 %v356, %v356
        %v361 = vpack.c.b16 %v357, %v357
        %v362 = vpack.c.b16 %v358, %v358
        %v431 = vunpack.c.l.b16 %v289
        %v432 = vunpack.c.l.b16 %v290
        %v433 = vunpack.c.l.b16 %v291
        %v434 = vunpack.c.l.b16 %v292
        %v435 = vunpack.c.l.b16 %v293
        %v436 = vunpack.c.l.b16 %v294
        %v437 = vunpack.c.l.b16 %v295
        %v438 = vunpack.c.l.b16 %v296
        %v439 = vunpack.c.l.b16 %v297
        %v440 = vunpack.c.l.b16 %v298
        %v441 = vunpack.c.l.b16 %v299
        %v442 = vunpack.c.l.b16 %v300
        %v443 = vunpack.c.l.b16 %v301
        %v444 = vunpack.c.l.b16 %v302
        %v445 = vunpack.c.l.b16 %v303
        %v446 = vunpack.c.l.b16 %v304
        %v447 = vunpack.c.l.b16 %v305
        %v448 = vunpack.c.l.b16 %v306
        %v449 = vunpack.c.l.b16 %v307
        %v450 = vunpack.c.l.b16 %v308
        %v451 = vunpack.c.l.b16 %v309
        %v452 = vunpack.c.l.b16 %v310
        %v453 = vunpack.c.l.b16 %v311
        %v454 = vunpack.c.l.b16 %v312
        %v455 = vunpack.c.l.b16 %v313
        %v456 = vunpack.c.l.b16 %v314
        %v457 = vunpack.c.l.b16 %v315
        %v458 = vunpack.c.l.b16 %v316
        %v459 = vunpack.c.l.b16 %v317
        %v460 = vunpack.c.l.b16 %v318
        %v461 = vunpack.c.l.b16 %v319
        %v462 = vunpack.c.l.b16 %v320
        %v463 = vunpack.c.l.b16 %v321
        %v464 = vunpack.c.l.b16 %v322
        %v465 = vunpack.c.l.b16 %v323
        %v466 = vunpack.c.l.b16 %v324
        %v467 = vunpack.c.l.b16 %v325
        %v468 = vunpack.c.l.b16 %v326
        %v469 = vunpack.c.l.b16 %v327
        %v470 = vunpack.c.l.b16 %v328
        %v471 = vunpack.c.l.b16 %v329
        %v472 = vunpack.c.l.b16 %v330
        %v473 = vunpack.c.l.b16 %v331
        %v474 = vunpack.c.l.b16 %v332
        %v475 = vunpack.c.l.b16 %v333
        %v476 = vunpack.c.l.b16 %v334
        %v477 = vunpack.c.l.b16 %v335
        %v478 = vunpack.c.l.b16 %v336
        %v479 = vunpack.c.l.b16 %v337
        %v480 = vunpack.c.l.b16 %v338
        %v481 = vunpack.c.l.b16 %v339
        %v482 = vunpack.c.l.b16 %v340
        %v483 = vunpack.c.l.b16 %v341
        %v484 = vunpack.c.l.b16 %v342
        %v485 = vunpack.c.l.b16 %v343
        %v486 = vunpack.c.l.b16 %v344
        %v487 = vunpack.c.l.b16 %v345
        %v488 = vunpack.c.l.b16 %v346
        %v489 = vunpack.c.l.b16 %v347
        %v490 = vunpack.c.l.b16 %v348
        %v491 = vunpack.c.l.b16 %v349
        %v492 = vunpack.c.l.b16 %v350
        %v493 = vunpack.c.l.b16 %v351
        %v494 = vunpack.c.l.b16 %v352
        %v495 = vpack.c.b16 %v432, %v431
        %v496 = vpack.c.b16 %v434, %v433
        %v497 = vpack.c.b16 %v436, %v435
        %v498 = vpack.c.b16 %v438, %v437
        %v499 = vpack.c.b16 %v440, %v439
        %v500 = vpack.c.b16 %v442, %v441
        %v501 = vpack.c.b16 %v444, %v443
        %v502 = vpack.c.b16 %v446, %v445
        %v503 = vpack.c.b16 %v448, %v447
        %v504 = vpack.c.b16 %v450, %v449
        %v505 = vpack.c.b16 %v452, %v451
        %v506 = vpack.c.b16 %v454, %v453
        %v507 = vpack.c.b16 %v456, %v455
        %v508 = vpack.c.b16 %v458, %v457
        %v509 = vpack.c.b16 %v460, %v459
        %v510 = vpack.c.b16 %v462, %v461
        %v511 = vpack.c.b16 %v464, %v463
        %v512 = vpack.c.b16 %v466, %v465
        %v513 = vpack.c.b16 %v468, %v467
        %v514 = vpack.c.b16 %v470, %v469
        %v515 = vpack.c.b16 %v472, %v471
        %v516 = vpack.c.b16 %v474, %v473
        %v517 = vpack.c.b16 %v476, %v475
        %v518 = vpack.c.b16 %v478, %v477
        %v519 = vpack.c.b16 %v480, %v479
        %v520 = vpack.c.b16 %v482, %v481
        %v521 = vpack.c.b16 %v484, %v483
        %v522 = vpack.c.b16 %v486, %v485
        %v523 = vpack.c.b16 %v488, %v487
        %v524 = vpack.c.b16 %v490, %v489
        %v525 = vpack.c.b16 %v492, %v491
        %v526 = vpack.c.b16 %v494, %v493
        %559 = vmatprep.subr.bf16.mxu0 0
        %560 = vmatpush1.bf16.msra.mxu0 %v495
        %561 = vmatprep.subr.bf16.mxu0 0
        %562 = vmatpush1.bf16.msra.mxu0 %v496
        %563 = vmatprep.subr.bf16.mxu0 0
        %564 = vmatpush1.bf16.msra.mxu0 %v497
        %565 = vmatprep.subr.bf16.mxu0 0
        %566 = vmatpush1.bf16.msra.mxu0 %v498
        %567 = vmatprep.subr.bf16.mxu0 0
        %568 = vmatpush1.bf16.msra.mxu0 %v499
        %569 = vmatprep.subr.bf16.mxu0 0
        %570 = vmatpush1.bf16.msra.mxu0 %v500
        %571 = vmatprep.subr.bf16.mxu0 0
        %572 = vmatpush1.bf16.msra.mxu0 %v501
        %573 = vmatprep.subr.bf16.mxu0 0
        %574 = vmatpush1.bf16.msra.mxu0 %v502
        %575 = vmatprep.subr.bf16.mxu0 0
        %576 = vmatpush1.bf16.msra.mxu0 %v503
        %577 = vmatprep.subr.bf16.mxu0 0
        %578 = vmatpush1.bf16.msra.mxu0 %v504
        %579 = vmatprep.subr.bf16.mxu0 0
        %580 = vmatpush1.bf16.msra.mxu0 %v505
        %581 = vmatprep.subr.bf16.mxu0 0
        %582 = vmatpush1.bf16.msra.mxu0 %v506
        %583 = vmatprep.subr.bf16.mxu0 0
        %584 = vmatpush1.bf16.msra.mxu0 %v507
        %585 = vmatprep.subr.bf16.mxu0 0
        %586 = vmatpush1.bf16.msra.mxu0 %v508
        %587 = vmatprep.subr.bf16.mxu0 0
        %588 = vmatpush1.bf16.msra.mxu0 %v509
        %589 = vmatprep.subr.bf16.mxu0 0
        %590 = vmatpush1.bf16.msra.mxu0 %v510
        %591 = vmatprep.mubr.bf16.mxu0 %v360
        %592 = vmatmul.mubr.bf16.gmra.mrb[0].mxu0 %v359
        %v593 = vpop.f32.mrb[0].mxu0
        %v594 = vadd.f32 0.0, %v593
        %v595 = vpop.f32.mrb[0].mxu0
        %v596 = vpop.f32.mrb[0].mxu0
        %v597 = vpop.f32.mrb[0].mxu0
        %598 = vdwg.mxu0
        %599 = vmatprep.subr.bf16.mxu0 0
        %600 = vmatpush1.bf16.msra.mxu0 %v511
        %601 = vmatprep.subr.bf16.mxu0 0
        %602 = vmatpush1.bf16.msra.mxu0 %v512
        %603 = vmatprep.subr.bf16.mxu0 0
        %604 = vmatpush1.bf16.msra.mxu0 %v513
        %605 = vmatprep.subr.bf16.mxu0 0
        %606 = vmatpush1.bf16.msra.mxu0 %v514
        %607 = vmatprep.subr.bf16.mxu0 0
        %608 = vmatpush1.bf16.msra.mxu0 %v515
        %609 = vmatprep.subr.bf16.mxu0 0
        %610 = vmatpush1.bf16.msra.mxu0 %v516
        %611 = vmatprep.subr.bf16.mxu0 0
        %612 = vmatpush1.bf16.msra.mxu0 %v517
        %613 = vmatprep.subr.bf16.mxu0 0
        %614 = vmatpush1.bf16.msra.mxu0 %v518
        %615 = vmatprep.subr.bf16.mxu0 0
        %616 = vmatpush1.bf16.msra.mxu0 %v519
        %617 = vmatprep.subr.bf16.mxu0 0
        %618 = vmatpush1.bf16.msra.mxu0 %v520
        %619 = vmatprep.subr.bf16.mxu0 0
        %620 = vmatpush1.bf16.msra.mxu0 %v521
        %621 = vmatprep.subr.bf16.mxu0 0
        %622 = vmatpush1.bf16.msra.mxu0 %v522
        %623 = vmatprep.subr.bf16.mxu0 0
        %624 = vmatpush1.bf16.msra.mxu0 %v523
        %625 = vmatprep.subr.bf16.mxu0 0
        %626 = vmatpush1.bf16.msra.mxu0 %v524
        %627 = vmatprep.subr.bf16.mxu0 0
        %628 = vmatpush1.bf16.msra.mxu0 %v525
        %629 = vmatprep.subr.bf16.mxu0 0
        %630 = vmatpush1.bf16.msra.mxu0 %v526
        %631 = vmatprep.mubr.bf16.mxu0 %v362
        %632 = vmatmul.mubr.bf16.gmra.mrb[0].mxu0 %v361
        %v633 = vpop.f32.mrb[0].mxu0
        %v634 = vadd.f32 %v594, %v633
        %v635 = vpop.f32.mrb[0].mxu0
        %v636 = vpop.f32.mrb[0].mxu0
        %v637 = vpop.f32.mrb[0].mxu0
        %638 = vdwg.mxu0
        %v639 = vadd.f32 %v286, %v634
        %640 = vst [vmem:[#allocation2] sm:$0xff] %v639
        %p641 = scmp.eq.s32.totalorder %s28, 1
        // Predicated region
        $region53: #{tpu_custom_call.1} parent=35 // pred_check
          %p642 = pneg %p641
        $region54: #{tpu_custom_call.1} parent=35 // pred_check_branch
          %644 = sbr.rel (%p642) target = $region56
        $region55: #{tpu_custom_call.1} parent=35 // pred_region
          %v645 = vld [vmem:[#allocation2] sm:$0xff]
          %s646 = sld [smem:[#allocation3]]
          %v647 = vstv %s646
          %v648 = vmul.f32 %v647, 1.442695
          %v649 = vpow.pop %v648
          %s650 = vtos %v649
          %v651 = vmul.f32 %v645, %v645
          %652 = vadd.xlane.f32.xlu0 %v651
          %v653 = vpop.xlane.xlu0 %652
          %v654 = vmax.f32 %v653, 1e-24
          %v655 = vrsqrt.pop %v654
          %v656 = vstv %s650
          %v657 = vmul.f32 %v655, %v656
          %v658 = vmul.f32 %v645, %v657
          %v659 = vpack.c.bf16 %v658, %v658
          %v660 = vld [vmem:[#allocation9] sm:$0xf]
          %v661 = vld [vmem:[#allocation9 + $0x4] sm:$0xf]
          %v662 = vld [vmem:[#allocation9 + $0x8] sm:$0xf]
          %v663 = vld [vmem:[#allocation9 + $0xc] sm:$0xf]
          %v664 = vld [vmem:[#allocation9 + $0x10] sm:$0xf]
          %v665 = vld [vmem:[#allocation9 + $0x14] sm:$0xf]
          %v666 = vld [vmem:[#allocation9 + $0x18] sm:$0xf]
          %v667 = vld [vmem:[#allocation9 + $0x1c] sm:$0xf]
          %v668 = vld [vmem:[#allocation9 + $0x20] sm:$0xf]
          %v669 = vld [vmem:[#allocation9 + $0x24] sm:$0xf]
          %v670 = vld [vmem:[#allocation9 + $0x28] sm:$0xf]
          %v671 = vld [vmem:[#allocation9 + $0x2c] sm:$0xf]
          %v672 = vld [vmem:[#allocation9 + $0x30] sm:$0xf]
          %v673 = vld [vmem:[#allocation9 + $0x34] sm:$0xf]
          %v674 = vld [vmem:[#allocation9 + $0x38] sm:$0xf]
          %v675 = vld [vmem:[#allocation9 + $0x3c] sm:$0xf]
          %v692 = vunpack.c.l.b16 %v660
          %v693 = vunpack.c.l.b16 %v661
          %v694 = vunpack.c.l.b16 %v662
          %v695 = vunpack.c.l.b16 %v663
          %v696 = vunpack.c.l.b16 %v664
          %v697 = vunpack.c.l.b16 %v665
          %v698 = vunpack.c.l.b16 %v666
          %v699 = vunpack.c.l.b16 %v667
          %v700 = vunpack.c.l.b16 %v668
          %v701 = vunpack.c.l.b16 %v669
          %v702 = vunpack.c.l.b16 %v670
          %v703 = vunpack.c.l.b16 %v671
          %v704 = vunpack.c.l.b16 %v672
          %v705 = vunpack.c.l.b16 %v673
          %v706 = vunpack.c.l.b16 %v674
          %v707 = vunpack.c.l.b16 %v675
          %v708 = vpack.c.b16 %v693, %v692
          %v709 = vpack.c.b16 %v695, %v694
          %v710 = vpack.c.b16 %v697, %v696
          %v711 = vpack.c.b16 %v699, %v698
          %v712 = vpack.c.b16 %v701, %v700
          %v713 = vpack.c.b16 %v703, %v702
          %v714 = vpack.c.b16 %v705, %v704
          %v715 = vpack.c.b16 %v707, %v706
          %724 = vmatprep.subr.bf16.mxu0 0
          %725 = vmatpush1.bf16.msra.mxu0 %v708
          %726 = vmatprep.subr.bf16.mxu0 0
          %727 = vmatpush1.bf16.msra.mxu0 %v709
          %728 = vmatprep.subr.bf16.mxu0 0
          %729 = vmatpush1.bf16.msra.mxu0 %v710
          %730 = vmatprep.subr.bf16.mxu0 0
          %731 = vmatpush1.bf16.msra.mxu0 %v711
          %732 = vmatprep.subr.bf16.mxu0 0
          %733 = vmatpush1.bf16.msra.mxu0 %v712
          %734 = vmatprep.subr.bf16.mxu0 0
          %735 = vmatpush1.bf16.msra.mxu0 %v713
          %736 = vmatprep.subr.bf16.mxu0 0
          %737 = vmatpush1.bf16.msra.mxu0 %v714
          %738 = vmatprep.subr.bf16.mxu0 0
          %739 = vmatpush1.bf16.msra.mxu0 %v715
          %740 = vmatprep.subr.bf16.mxu0 0
          %741 = vmatpush1.bf16.msra.mxu0 0
          %742 = vmatprep.subr.bf16.mxu0 0
          %743 = vmatpush1.bf16.msra.mxu0 0
          %744 = vmatprep.subr.bf16.mxu0 0
          %745 = vmatpush1.bf16.msra.mxu0 0
          %746 = vmatprep.subr.bf16.mxu0 0
          %747 = vmatpush1.bf16.msra.mxu0 0
          %748 = vmatprep.subr.bf16.mxu0 0
          %749 = vmatpush1.bf16.msra.mxu0 0
          %750 = vmatprep.subr.bf16.mxu0 0
          %751 = vmatpush1.bf16.msra.mxu0 0
          %752 = vmatprep.subr.bf16.mxu0 0
          %753 = vmatpush1.bf16.msra.mxu0 0
          %754 = vmatprep.subr.bf16.mxu0 0
          %755 = vmatpush1.bf16.msra.mxu0 0
          %756 = vmatprep.mubr.bf16.mxu0 0
          %757 = vmatmul.mubr.bf16.gmra.mrb[0].mxu0 %v659
          %v758 = vpop.f32.mrb[0].mxu0
          %v759 = vadd.f32 0.0, %v758
          %v760 = vpop.f32.mrb[0].mxu0
          %v761 = vpop.f32.mrb[0].mxu0
          %v762 = vpop.f32.mrb[0].mxu0
          %763 = vdwg.mxu0
          %764 = vst [vmem:[#allocation10] sm:$0xff] %v759
        $region56: #{tpu_custom_call.1} parent=35 // pred_fallthru
          _
        // Predicated region
        $region57: #{tpu_custom_call.1} parent=35 // pred_check
          %p765 = pneg %p149
        $region58: #{tpu_custom_call.1} parent=35 // pred_check_branch
          %767 = sbr.rel (%p765) target = $region60
        $region59: #{tpu_custom_call.1} parent=35 // pred_region
          %s769 = ssub.s32 128, 128
          %770 = vsyncadd [#allocation6], %s769
          %s771 = smul.addr %s27, 128
          %s772 = scalar_lea.hbm %s4, %s771
          %s774 = sshll.u32 [#allocation10], 4
          %s775 = int_to_ptr.vmem [resolvable:$true] %s774
          %777 = dma.vmem_to_hbm [thread:$0]  %s775, 128, %s772, [#allocation6]
        $region60: #{tpu_custom_call.1} parent=35 // pred_fallthru
          _
        // Predicated region
        $region61: #{tpu_custom_call.1} parent=35 // pred_check
          %p778 = pneg %p149
        $region62: #{tpu_custom_call.1} parent=35 // pred_check_branch
          %780 = sbr.rel (%p778) target = $region64
        $region63: #{tpu_custom_call.1} parent=35 // pred_region
          %781 = dma.done [#allocation6], 128
        $region64: #{tpu_custom_call.1} parent=35 // pred_fallthru
          _
      $region36: #{tpu_custom_call.1} parent=5 // pred_fallthru
        _
      %p782 = scmp.le.s32.totalorder 2, %s18
      // Predicated region
      $region65: #{tpu_custom_call.1} parent=5 // pred_check
        %p783 = pneg %p782
      $region66: #{tpu_custom_call.1} parent=5 // pred_check_branch
        %785 = sbr.rel (%p783) target = $region68
      $region67: #{tpu_custom_call.1} parent=5 // pred_region
        %s786 = ssub.s32 %s18, 2
      $region68: #{tpu_custom_call.1} parent=5 // pred_fallthru
        _
    $region6: #{tpu_custom_call.1} parent=1 // loop_footer
      %s22 = sadd.s32 1, %s18
    $region7: #{tpu_custom_call.1} parent=1 // loop_footer_branch
      %17 = sbr.rel target = $region3
    $region8: #{tpu_custom_call.1} parent=1 // loop_exit
      _
    %787 = vsyncpa [#allocation5], 1
    %s788 = scalar_lea.sflag [#allocation5], 1
    %789 = vsyncpa %s788, 1
    %790 = vsyncpa [#allocation8], 1
    %s791 = scalar_lea.sflag [#allocation8], 1
    %792 = vsyncpa %s791, 1
    %793 = vsyncpa [#allocation6], 1
    %s794 = scalar_lea.sflag [#allocation6], 1
    %795 = vsyncpa %s794, 1

</llo_original>
